<compile_context>
chip_gen: v6e
topology: v6e:2x2x1
jax: 0.10.0
libtpu: 0.0.40
codegen_flags: <defaults>
</compile_context>

<pallas_src>
import functools
import math

import jax
import jax.numpy as jnp
from jax.experimental import pallas as pl
from jax.experimental.pallas import tpu as pltpu

EPS = 1e-6
P_INIT = 3.0          # nn.Parameter(torch.ones(1) * 3)


def _gem_kernel_dyn(p_ref, x_ref, o_ref, *, eps, hw):
    """Runtime (learnable) p. Log-domain, row-max-shifted mean (range safe).

    p_ref: (1,) f32 SMEM;  x_ref: (rows, hw) VMEM;  o_ref: (rows, 1) f32 VMEM.
    """
    p = p_ref[0]
    inv_p = 1.0 / p                                        # one scalar divide / call
    x = x_ref[...].astype(jnp.float32)                     # accept bf16 without upcasting in HBM
    xc = jnp.maximum(x, eps)                               # clamp(min=eps)        (VPU)
    z = p * jnp.log(xc)                                    # p * log(x)            (EUP)
    zmax = jnp.max(z, axis=-1, keepdims=True)              # row max               (XLU)
    s = jnp.sum(jnp.exp(z - zmax), axis=-1, keepdims=True)  # shifted exp + reduce (EUP/XLU)
    # mean folded into log domain: log(mean) = zmax + log(sum) - log(H*W)
    log_mean = zmax + jnp.log(s) - math.log(hw)
    o_ref[...] = jnp.exp(log_mean * inv_p)                 # ^(1/p)                (EUP, per row only)


def _gem_kernel_static(x_ref, o_ref, *, eps, hw, p_int):
    """Static integer p fast path: per-element work is VPU multiplies only."""
    x = x_ref[...].astype(jnp.float32)
    xc = jnp.maximum(x, eps)
    xp = xc
    for _ in range(int(p_int) - 1):                        # unrolled at trace time (p=3 -> 2 muls)
        xp = xp * xc
    m = jnp.sum(xp, axis=-1, keepdims=True) * (1.0 / hw)
    # only per-row transcendentals remain (hw-fold fewer than the log/exp path)
    o_ref[...] = jnp.exp(jnp.log(m) * (1.0 / int(p_int)))


def _pick_row_tile(bc, hw, itemsize, target_bytes=1 << 20):
    """Row tile ~target_bytes per input buffer, multiple of 8, divides bc if possible."""
    tr = max(8, min(bc, target_bytes // max(1, hw * itemsize)))
    tr = max(8, (tr // 8) * 8)
    while bc % tr != 0 and tr > 8:
        tr -= 8
    if bc % tr != 0:
        tr = bc                                            # full-extent block is always legal
    return tr


def gem_forward(x, p=None, eps=EPS, static_p=None, row_tile=None):
    """x: (B, C, H, W) f32/bf16, p: (1,) f32  ->  (B, C, 1, 1) in x.dtype."""
    B, C, H, W = x.shape
    bc, hw = B * C, H * W
    x2 = x.reshape(bc, hw)                                 # contiguous lane-dense view
    itemsize = jnp.dtype(x2.dtype).itemsize
    out_shape = jax.ShapeDtypeStruct((bc, 1), jnp.float32)

    if static_p is not None:
        kernel = functools.partial(_gem_kernel_static, eps=eps, hw=hw, p_int=int(static_p))
    else:
        kernel = functools.partial(_gem_kernel_dyn, eps=eps, hw=hw)

    # ---- Regime 1: small activation -> single grid-less call (overhead-bound). ----
    if bc * hw * itemsize <= (512 << 10):
        if static_p is not None:
            in_specs = [pl.BlockSpec(memory_space=pltpu.MemorySpace.VMEM)]
            args = (x2,)
        else:
            in_specs = [pl.BlockSpec(memory_space=pltpu.MemorySpace.SMEM),   # p
                        pl.BlockSpec(memory_space=pltpu.MemorySpace.VMEM)]   # x slab
            args = (p, x2)
        out = pl.pallas_call(
            kernel,
            out_shape=out_shape,
            in_specs=in_specs,
            out_specs=pl.BlockSpec(memory_space=pltpu.MemorySpace.VMEM),
        )(*args)
        return out.reshape(B, C, 1, 1).astype(x.dtype)

    # ---- Regime 2: stream over B*C rows with auto-pipelined tiles. ----
    tr = row_tile or _pick_row_tile(bc, hw, itemsize)
    grid = (pl.cdiv(bc, tr),)
    block_bytes = tr * hw * itemsize
    cp_kwargs = dict(dimension_semantics=("parallel",))    # shard rows over v7x's 2 TCs
    if 2 * block_bytes > (12 << 20):                       # leave double-buffer headroom
        cp_kwargs["vmem_limit_bytes"] = int(min(4 * block_bytes + (8 << 20), 100 << 20))
    cp = pltpu.CompilerParams(**cp_kwargs)

    x_spec = pl.BlockSpec((tr, hw), lambda i: (i, 0))
    o_spec = pl.BlockSpec((tr, 1), lambda i: (i, 0))
    if static_p is not None:
        out = pl.pallas_call(
            kernel, out_shape=out_shape, grid=grid,
            in_specs=[x_spec], out_specs=o_spec, compiler_params=cp,
        )(x2)
    else:
        out = pl.pallas_call(
            kernel, out_shape=out_shape, grid=grid,
            in_specs=[pl.BlockSpec(memory_space=pltpu.MemorySpace.SMEM),    # p (whole array)
                      x_spec],
            out_specs=o_spec, compiler_params=cp,
        )(p, x2)
    return out.reshape(B, C, 1, 1).astype(x.dtype)


def gem_reference(x, p, eps=EPS):
    pv = p[0]
    xf = x.astype(jnp.float32)
    xp = jnp.maximum(xf, eps) ** pv
    return jnp.mean(xp, axis=(-2, -1), keepdims=True) ** (1.0 / pv)


if __name__ == "__main__":
    key = jax.random.PRNGKey(0)
    p = jnp.full((1,), P_INIT, jnp.float32)

    # 1) Module-spec shape: grid-less single call, runtime (learnable) p.
    x_small = jax.random.normal(key, (2, 4, 16, 16), jnp.float32)
    out_small = jax.jit(functools.partial(gem_forward, eps=EPS))(x_small, p)
    jax.block_until_ready(out_small)
    assert out_small.shape == (2, 4, 1, 1)
    assert jnp.allclose(out_small, gem_reference(x_small, p), rtol=1e-4, atol=1e-5)

    # 2) Larger activation: exercises the gridded, megacore-parallel streaming path.
    x_big = jax.random.normal(jax.random.PRNGKey(1), (8, 256, 16, 16), jnp.float32)
    out_big = jax.jit(functools.partial(gem_forward, eps=EPS))(x_big, p)
    jax.block_until_ready(out_big)
    assert out_big.shape == (8, 256, 1, 1)
    assert jnp.allclose(out_big, gem_reference(x_big, p), rtol=1e-4, atol=1e-5)

    # 3) Static integer-p fast path (frozen p=3): VPU multiplies, no per-element EUP.
    out_fast = jax.jit(functools.partial(gem_forward, eps=EPS, static_p=3))(x_big, p)
    jax.block_until_ready(out_fast)
    assert jnp.allclose(out_fast, gem_reference(x_big, p), rtol=1e-4, atol=1e-5)

    # 4) bf16 input accepted (half HBM traffic); compute stays f32 in-kernel.
    x_bf16 = x_small.astype(jnp.bfloat16)
    out_bf16 = jax.jit(functools.partial(gem_forward, eps=EPS))(x_bf16, p)
    jax.block_until_ready(out_bf16)
    assert jnp.allclose(out_bf16.astype(jnp.float32),
                        gem_reference(x_bf16, p), rtol=2e-2, atol=2e-2)

    print("KERNEL_OK")
</pallas_src>

<mosaic_0001>
module attributes {stable_mosaic.version = 11 : i64} {
  func.func @_gem_kernel_dyn(%arg0: memref<1xf32, #tpu.memory_space<smem>>, %arg1: memref<8x256xf32, #tpu.memory_space<vmem>>, %arg2: memref<8x1xf32, #tpu.memory_space<vmem>>) attributes {dimension_semantics = [], scalar_prefetch = 0 : i64, scratch_operands = 0 : i64, tpu.core_type = #tpu.core_type<tc>} {
    %c0 = arith.constant 0 : index
    %0 = memref.load %arg0[%c0] : memref<1xf32, #tpu.memory_space<smem>>
    %cst = arith.constant 1.000000e+00 : f32
    %1 = arith.divf %cst, %0 : f32
    %c0_0 = arith.constant 0 : index
    %c0_1 = arith.constant 0 : index
    %2 = vector.load %arg1[%c0_0, %c0_1] : memref<8x256xf32, #tpu.memory_space<vmem>>, vector<8x256xf32>
    %cst_2 = arith.constant 9.99999997E-7 : f32
    %3 = vector.broadcast %cst_2 : f32 to vector<8x256xf32>
    %4 = arith.maximumf %2, %3 : vector<8x256xf32>
    %5 = math.log %4 : vector<8x256xf32>
    %6 = vector.broadcast %0 : f32 to vector<8x256xf32>
    %7 = arith.mulf %6, %5 : vector<8x256xf32>
    %cst_3 = arith.constant dense<0xFF800000> : vector<8xf32>
    %8 = vector.multi_reduction <maximumf>, %7, %cst_3 [1] : vector<8x256xf32> to vector<8xf32>
    %9 = vector.shape_cast %8 : vector<8xf32> to vector<8x1xf32>
    %10 = vector.broadcast %9 : vector<8x1xf32> to vector<8x256xf32>
    %11 = arith.subf %7, %10 : vector<8x256xf32>
    %12 = math.exp %11 : vector<8x256xf32>
    %cst_4 = arith.constant dense<0.000000e+00> : vector<8xf32>
    %13 = vector.multi_reduction <add>, %12, %cst_4 [1] : vector<8x256xf32> to vector<8xf32>
    %14 = vector.shape_cast %13 : vector<8xf32> to vector<8x1xf32>
    %15 = math.log %14 : vector<8x1xf32>
    %16 = arith.addf %9, %15 : vector<8x1xf32>
    %cst_5 = arith.constant 5.54517746 : f32
    %17 = vector.broadcast %cst_5 : f32 to vector<8x1xf32>
    %18 = arith.subf %16, %17 : vector<8x1xf32>
    %19 = vector.broadcast %1 : f32 to vector<8x1xf32>
    %20 = arith.mulf %18, %19 : vector<8x1xf32>
    %21 = math.exp %20 : vector<8x1xf32>
    %c0_6 = arith.constant 0 : index
    %c0_7 = arith.constant 0 : index
    %22 = vector.load %arg2[%c0_6, %c0_7] : memref<8x1xf32, #tpu.memory_space<vmem>>, vector<8x1xf32>
    tpu.vector_store %arg2[%c0_6, %c0_7], %21 {strides = array<i32>} : memref<8x1xf32, #tpu.memory_space<vmem>>, vector<8x1xf32>,
    return
  }
}

</mosaic_0001>

<llo_original>
// kernel: gem_forward.1
$region0: #{gem_forward.1}
  #allocation0 [shape = 'u32[]', space=smem, size = 0x4, offset = 0x4, fixed_abs, tag = 'smem constant byte address 0x4 - core index']
  #allocation1 [shape = 'u32[144,128]{1,0:T(1,128)}', space=vmem, size = 0x12000, scoped, tag = 'internal scratch']
  #allocation2 [shape = 'f32[1]{0:T(128)S(6)}', space=smem, size = 0x200, scoped, tag = 'scoped memory for gem_forward.1']
  %s0 = inlined_call_operand.<no memory space> [shape: f32[1], index: 0, kind: input, shape index: {}]
  %s1 = inlined_call_operand.vmem [shape: f32[8,256], index: 1, kind: input, shape index: {}]
  %s2 = inlined_call_operand.vmem [shape: f32[8,1], index: 2, kind: output, shape index: {}]
  %s3 = sld [smem:[#allocation0]]
  $region18: #{gem_forward.1} parent=0
    _
  %s5 = ssub.s32 1, %s3
  %s6 = scalar_select 0, %s5, %s3
  %7 = sst [smem:[#allocation2]] %s0
  // Predicated region
  $region2: #{gem_forward.1} parent=0 // pred_check
    _
  $region3: #{gem_forward.1} parent=0 // pred_check_branch
    %9 = sbr.rel (0) target = $region5
  $region4: #{gem_forward.1} parent=0 // pred_region
    _
  $region5: #{gem_forward.1} parent=0 // pred_fallthru
    _
  // Predicated region
  $region6: #{gem_forward.1} parent=0 // pred_check
    _
  $region7: #{gem_forward.1} parent=0 // pred_check_branch
    %11 = sbr.rel (0) target = $region9
  $region8: #{gem_forward.1} parent=0 // pred_region
    _
  $region9: #{gem_forward.1} parent=0 // pred_fallthru
    _
  %s12 = sld [smem:[#allocation2]]
  %v13 = vstv %s12
  %v14 = vrcp.pop %v13
  %s15 = vtos %v14
  %v16 = vld [vmem:[%s1] sm:$0xff]
  %v17 = vld [vmem:[%s1 + $0x8] sm:$0xff]
  %v18 = vmax.f32 %v16, 1e-06
  %v19 = vmax.f32 %v17, 1e-06
  %v20 = vlog2.pop %v18
  %v21 = vmul.f32 %v20, 0.6931472
  %v22 = vlog2.pop %v19
  %v23 = vmul.f32 %v22, 0.6931472
  %v24 = vstv %s12
  %v25 = vmul.f32 %v24, %v21
  %v26 = vmul.f32 %v24, %v23
  %v27 = vmax.f32 %v25, %v26
  %28 = vmax.xlane.f32.xlu0 %v27
  %v29 = vpop.xlane.xlu0 %28
  %v30 = vsub.f32 %v25, %v29
  %v31 = vsub.f32 %v26, %v29
  %v32 = vmul.f32 %v30, 1.442695
  %v33 = vpow.pop %v32
  %v34 = vmul.f32 %v31, 1.442695
  %v35 = vpow.pop %v34
  %v36 = vadd.f32 %v33, %v35
  %37 = vadd.xlane.f32.xlu0 %v36
  %v38 = vpop.xlane.xlu0 %37
  %v39 = vlog2.pop %v38
  %v40 = vmul.f32 %v39, 0.6931472
  %v41 = vadd.f32 %v29, %v40
  %v42 = vsub.f32 %v41, 5.5451775
  %v43 = vstv %s15
  %v44 = vmul.f32 %v42, %v43
  %v45 = vmul.f32 %v44, 1.442695
  %v46 = vpow.pop %v45
  %vm47 = vcmask 7168
  %48 = vst.msk [vmem:[%s2] sm:$0xff] %vm47, %v46
  // Predicated region
  $region10: #{gem_forward.1} parent=0 // pred_check
    _
  $region11: #{gem_forward.1} parent=0 // pred_check_branch
    %50 = sbr.rel (0) target = $region13
  $region12: #{gem_forward.1} parent=0 // pred_region
    _
  $region13: #{gem_forward.1} parent=0 // pred_fallthru
    _
  // Predicated region
  $region14: #{gem_forward.1} parent=0 // pred_check
    _
  $region15: #{gem_forward.1} parent=0 // pred_check_branch
    %52 = sbr.rel (0) target = $region17
  $region16: #{gem_forward.1} parent=0 // pred_region
    _
  $region17: #{gem_forward.1} parent=0 // pred_fallthru
    _

</llo_original>
